<compile_context>
chip_gen: v7x
topology: tpu7x:2x2x1
jax: 0.10.0
libtpu: 0.0.40
codegen_flags: <defaults>
</compile_context>

<pallas_src>
import functools

import jax
import jax.numpy as jnp
from jax.experimental import pallas as pl
from jax.experimental.pallas import tpu as pltpu

_NEG_SLOPE = 0.2      # PyG GATConv default negative_slope
_MASK_VALUE = -1e30   # additive logit mask for non-edges
_M_INIT = -1e20       # running-max init: >> _MASK_VALUE, << any real logit


def _round_up(n, m):
    return ((n + m - 1) // m) * m


def _pick_tile(n_pad, cap):
    # largest tile (multiple of 128, <= cap) that divides the padded node count
    for t in (512, 256, 128):
        if t <= cap and n_pad % t == 0:
            return t
    return n_pad


def _att_matrix(att, heads, out_ch):
    """Expand per-head attention vectors [H, C] into a block-diagonal [H*C, H]
    matrix so per-node scores become one MXU matmul:
    a[:, g] = sum_c xp[:, g*C + c] * att[g, c]."""
    eye = jnp.eye(heads, dtype=att.dtype)
    return (att[:, :, None] * eye[:, None, :]).reshape(heads * out_ch, heads)


# --------------------------- projection kernel ------------------------------

def _gat_project_kernel(x_ref, w_ref, ms_ref, md_ref, xp_ref, asrc_ref, adst_ref):
    x = x_ref[...]                                                        # [T, Fin]
    xp = jnp.dot(x, w_ref[...], preferred_element_type=jnp.float32)      # [T, H*C]
    a_src = jnp.dot(xp, ms_ref[...], preferred_element_type=jnp.float32)  # [T, H]
    a_dst = jnp.dot(xp, md_ref[...], preferred_element_type=jnp.float32)  # [T, H]
    xp_ref[...] = xp.astype(xp_ref.dtype)   # bf16: halves DMA, MXU operand later
    asrc_ref[...] = a_src
    adst_ref[...] = a_dst


def gat_project(x, w, amat_src, amat_dst, *, tile_i):
    n_pad, f_in = x.shape
    hc = w.shape[1]
    h = amat_src.shape[1]
    grid = (n_pad // tile_i,)
    return pl.pallas_call(
        _gat_project_kernel,
        grid=grid,
        in_specs=[
            pl.BlockSpec((tile_i, f_in), lambda i: (i, 0)),
            pl.BlockSpec((f_in, hc), lambda i: (0, 0)),
            pl.BlockSpec((hc, h), lambda i: (0, 0)),
            pl.BlockSpec((hc, h), lambda i: (0, 0)),
        ],
        out_specs=(
            pl.BlockSpec((tile_i, hc), lambda i: (i, 0)),
            pl.BlockSpec((tile_i, h), lambda i: (i, 0)),
            pl.BlockSpec((tile_i, h), lambda i: (i, 0)),
        ),
        out_shape=(
            jax.ShapeDtypeStruct((n_pad, hc), jnp.bfloat16),   # xp (bf16)
            jax.ShapeDtypeStruct((n_pad, h), jnp.float32),     # a_src
            jax.ShapeDtypeStruct((n_pad, h), jnp.float32),     # a_dst
        ),
        compiler_params=pltpu.CompilerParams(
            dimension_semantics=("parallel",)),
    )(x, w, amat_src, amat_dst)


# ---------------------------- attention kernel -------------------------------

def _gat_attention_kernel(asrct_ref, adst_ref, xp_ref, adj_ref, b_ref, o_ref,
                          m_sc, l_sc, acc_sc,
                          *, heads, out_ch, concat, apply_sigmoid):
    H, C = heads, out_ch
    k = pl.program_id(1)

    @pl.when(k == 0)
    def _():
        m_sc[...] = jnp.full_like(m_sc, _M_INIT)
        l_sc[...] = jnp.zeros_like(l_sc)
        acc_sc[...] = jnp.zeros_like(acc_sc)

    # edge mask hoisted out of the head loop as a single additive bias
    mask_bias = jnp.where(adj_ref[...] != 0,
                          jnp.float32(0.0), jnp.float32(_MASK_VALUE))   # [Ti, Tk]
    a_src = asrct_ref[...]     # [H, Tk]  sources along lanes
    a_dst = adst_ref[...]      # [Ti, H]

    for h in range(H):         # static unroll; per-head state lives in VMEM scratch
        c0, c1 = h * C, (h + 1) * C
        e = a_dst[:, h:h + 1] + a_src[h:h + 1, :]             # [Ti, Tk]
        e = jnp.where(e > 0, e, _NEG_SLOPE * e) + mask_bias   # LeakyReLU + mask
        m_prev = m_sc[:, h:h + 1]                             # [Ti, 1]
        m_new = jnp.maximum(m_prev, jnp.max(e, axis=-1, keepdims=True))
        corr = jnp.exp(m_prev - m_new)                        # online-softmax rescale
        p = jnp.exp(e - m_new)          # masked lanes underflow to exactly 0
        l_sc[:, h:h + 1] = corr * l_sc[:, h:h + 1] + jnp.sum(p, axis=-1, keepdims=True)
        acc_sc[:, c0:c1] = (corr * acc_sc[:, c0:c1]
                            + jnp.dot(p.astype(jnp.bfloat16), xp_ref[:, c0:c1],
                                      preferred_element_type=jnp.float32))
        m_sc[:, h:h + 1] = m_new

    @pl.when(k == pl.num_programs(1) - 1)
    def _():
        # normalize AFTER the aggregation matmul (tiny [Ti, C] per-head pass);
        # self loops guarantee l >= 1, so the reciprocal is always finite.
        for h in range(H):
            c0, c1 = h * C, (h + 1) * C
            inv = pl.reciprocal(l_sc[:, h:h + 1], approx=True)
            acc_sc[:, c0:c1] = acc_sc[:, c0:c1] * inv
        if concat or H == 1:
            res = acc_sc[...]                    # already in concatenated layout
        else:
            res = acc_sc[:, 0:C]
            for h in range(1, H):
                res = res + acc_sc[:, h * C:(h + 1) * C]
            res = res * jnp.float32(1.0 / H)
        res = res + b_ref[...]
        if apply_sigmoid:
            res = 1.0 / (1.0 + jnp.exp(-res))
        o_ref[...] = res.astype(o_ref.dtype)


def gat_attention(asrct, adst, xp, adj, bias, *, heads, out_ch, concat,
                  apply_sigmoid, tile_i, tile_k, out_dtype):
    n_pad = adst.shape[0]
    hc = xp.shape[1]
    out_dim = heads * out_ch if concat else out_ch
    grid = (n_pad // tile_i, n_pad // tile_k)
    kernel = functools.partial(_gat_attention_kernel, heads=heads,
                               out_ch=out_ch, concat=concat,
                               apply_sigmoid=apply_sigmoid)

    # explicit scoped-VMEM limit sized from blocks + scratch + slab temporaries
    blocks = (heads * tile_k * 4 + tile_i * heads * 4 + tile_k * hc * 2
              + tile_i * tile_k * 1 + out_dim * 4 + tile_i * out_dim * 4)
    scratch = 2 * tile_i * heads * 4 + tile_i * heads * out_ch * 4
    slabs = 6 * tile_i * tile_k * 4
    vmem_limit = int(min(48 * 2**20, max(32 * 2**20, 2 * blocks + scratch + slabs)))

    return pl.pallas_call(
        kernel,
        grid=grid,
        in_specs=[
            pl.BlockSpec((heads, tile_k), lambda i, k: (0, k)),   # a_src^T chunk
            pl.BlockSpec((tile_i, heads), lambda i, k: (i, 0)),   # a_dst row tile
            pl.BlockSpec((tile_k, hc), lambda i, k: (k, 0)),      # xp chunk (bf16)
            pl.BlockSpec((tile_i, tile_k), lambda i, k: (i, k)),  # adj tile (int8)
            pl.BlockSpec((1, out_dim), lambda i, k: (0, 0)),      # bias
        ],
        out_specs=pl.BlockSpec((tile_i, out_dim), lambda i, k: (i, 0)),
        out_shape=jax.ShapeDtypeStruct((n_pad, out_dim), out_dtype),
        scratch_shapes=[
            pltpu.VMEM((tile_i, heads), jnp.float32),             # running max
            pltpu.VMEM((tile_i, heads), jnp.float32),             # running denom
            pltpu.VMEM((tile_i, heads * out_ch), jnp.float32),    # un-normalized acc
        ],
        compiler_params=pltpu.CompilerParams(
            dimension_semantics=("parallel", "arbitrary"),
            vmem_limit_bytes=vmem_limit),
    )(asrct, adst, xp, adj, bias)


# ------------------------------ layer / model --------------------------------

def gat_layer(x_pad, adj_pad, w, att_src, att_dst, bias, *, heads, out_ch,
              concat, apply_sigmoid, tile_i, tile_k, out_dtype):
    if x_pad.dtype == jnp.bfloat16:
        w = w.astype(jnp.bfloat16)          # keep the projection matmul bf16 x bf16
    amat_src = _att_matrix(att_src, heads, out_ch)
    amat_dst = _att_matrix(att_dst, heads, out_ch)
    xp, a_src, a_dst = gat_project(x_pad, w, amat_src, amat_dst, tile_i=tile_i)
    asrct = jnp.transpose(a_src)            # tiny [N, H] -> [H, N] layout plumbing
    return gat_attention(asrct, a_dst, xp, adj_pad, bias, heads=heads,
                         out_ch=out_ch, concat=concat,
                         apply_sigmoid=apply_sigmoid, tile_i=tile_i,
                         tile_k=tile_k, out_dtype=out_dtype)


def gat_forward(x, adj, params, *, num_heads, hidden_channels, out_channels):
    n = x.shape[0]
    n_pad = _round_up(n, 128)
    tile_i = _pick_tile(n_pad, 256)
    tile_k = _pick_tile(n_pad, 512)

    # Pad nodes to a lane-friendly count; add self loops on EVERY row (matches
    # PyG add_self_loops=True and keeps the masked-softmax denominator >= 1).
    x_pad = jnp.zeros((n_pad, x.shape[1]), jnp.float32).at[:n, :].set(
        x.astype(jnp.float32))
    adj_pad = jnp.zeros((n_pad, n_pad), jnp.float32).at[:n, :n].set(adj)
    adj_pad = jnp.maximum(adj_pad, jnp.eye(n_pad, dtype=jnp.float32))
    adj_pad = (adj_pad > 0).astype(jnp.int8)     # int8 mask: 1/4 the DMA of f32

    # gat1: in -> hidden, H heads, concat=True; bf16 activations for layer 2.
    h = gat_layer(x_pad, adj_pad, params["w1"], params["as1"], params["ad1"],
                  params["b1"], heads=num_heads, out_ch=hidden_channels,
                  concat=True, apply_sigmoid=False, tile_i=tile_i,
                  tile_k=tile_k, out_dtype=jnp.bfloat16)

    # gat2: hidden*H -> out, 1 head, concat=False (mean of 1 head), + sigmoid.
    # out_channels is tiny (2) -> zero-pad to 128 for lane-dense stores.
    c2 = out_channels
    c2_pad = _round_up(c2, 128)
    w2 = jnp.zeros((params["w2"].shape[0], c2_pad), jnp.float32).at[:, :c2].set(params["w2"])
    as2 = jnp.zeros((1, c2_pad), jnp.float32).at[:, :c2].set(params["as2"])
    ad2 = jnp.zeros((1, c2_pad), jnp.float32).at[:, :c2].set(params["ad2"])
    b2 = jnp.zeros((1, c2_pad), jnp.float32).at[:, :c2].set(params["b2"])
    y = gat_layer(h, adj_pad, w2, as2, ad2, b2, heads=1, out_ch=c2_pad,
                  concat=False, apply_sigmoid=True, tile_i=tile_i,
                  tile_k=tile_k, out_dtype=jnp.float32)
    return y[:n, :c2]


# ----------------------------- pure-JAX reference ----------------------------

def _gat_conv_ref(x, w, att_src, att_dst, bias, adj, heads, out_ch, concat):
    n = x.shape[0]
    xp = (x @ w).reshape(n, heads, out_ch)
    a_src = jnp.sum(xp * att_src[None], axis=-1)
    a_dst = jnp.sum(xp * att_dst[None], axis=-1)
    e = a_src[None, :, :] + a_dst[:, None, :]
    e = jnp.where(e > 0, e, _NEG_SLOPE * e)
    m3 = adj[:, :, None] > 0
    e = jnp.where(m3, e, _MASK_VALUE)
    e = e - jnp.max(e, axis=1, keepdims=True)
    p = jnp.where(m3, jnp.exp(e), 0.0)
    alpha = p / jnp.sum(p, axis=1, keepdims=True)
    out = jnp.einsum('ijh,jhc->ihc', alpha, xp)
    out = out.reshape(n, heads * out_ch) if concat else jnp.mean(out, axis=1)
    return out + bias


def gat_reference(x, adj, params, *, num_heads, hidden_channels, out_channels):
    h = _gat_conv_ref(x, params["w1"], params["as1"], params["ad1"],
                      params["b1"], adj, num_heads, hidden_channels, True)
    y = _gat_conv_ref(h, params["w2"], params["as2"], params["ad2"],
                      params["b2"], adj, 1, out_channels, False)
    return jax.nn.sigmoid(y)


# --------------------------------- params ------------------------------------

def init_params(key, in_channels, hidden_channels, out_channels, num_heads):
    ks = jax.random.split(key, 8)

    def glorot(k, shape):
        fan_in, fan_out = shape[0], shape[-1]
        lim = jnp.sqrt(6.0 / (fan_in + fan_out))
        return jax.random.uniform(k, shape, jnp.float32, -lim, lim)

    return {
        # layer 1: in -> hidden, H heads
        "w1": glorot(ks[0], (in_channels, num_heads * hidden_channels)),
        "as1": 0.1 * jax.random.normal(ks[1], (num_heads, hidden_channels), jnp.float32),
        "ad1": 0.1 * jax.random.normal(ks[2], (num_heads, hidden_channels), jnp.float32),
        "b1": jnp.zeros((1, num_heads * hidden_channels), jnp.float32),
        # layer 2: hidden*H -> out, 1 head
        "w2": glorot(ks[3], (num_heads * hidden_channels, out_channels)),
        "as2": 0.1 * jax.random.normal(ks[4], (1, out_channels), jnp.float32),
        "ad2": 0.1 * jax.random.normal(ks[5], (1, out_channels), jnp.float32),
        "b2": jnp.zeros((1, out_channels), jnp.float32),
    }


if __name__ == "__main__":
    # Small synthetic graph consistent with the module's forward signature.
    N = 8                # nodes
    E = 16               # edges
    IN_CHANNELS = 4
    HIDDEN_CHANNELS = 8
    OUT_CHANNELS = 2
    NUM_HEADS = 16       # module default

    key = jax.random.PRNGKey(0)
    k_x, k_src, k_dst, k_p = jax.random.split(key, 4)

    x = jax.random.normal(k_x, (N, IN_CHANNELS), jnp.float32)
    src = jax.random.randint(k_src, (E,), 0, N)
    dst = jax.random.randint(k_dst, (E,), 0, N)
    edge_index = jnp.stack([src, dst])   # [2, E], PyG convention (adj built from it)

    # Dense adjacency mask with self loops: adj[i, j] = 1 if edge j -> i or i == j.
    adj = jnp.zeros((N, N), jnp.float32).at[dst, src].set(1.0)
    adj = jnp.maximum(adj, jnp.eye(N, dtype=jnp.float32))

    params = init_params(k_p, IN_CHANNELS, HIDDEN_CHANNELS, OUT_CHANNELS, NUM_HEADS)

    out = gat_forward(x, adj, params, num_heads=NUM_HEADS,
                      hidden_channels=HIDDEN_CHANNELS, out_channels=OUT_CHANNELS)
    out = jax.block_until_ready(out)

    ref = gat_reference(x, adj, params, num_heads=NUM_HEADS,
                        hidden_channels=HIDDEN_CHANNELS, out_channels=OUT_CHANNELS)

    assert out.shape == (N, OUT_CHANNELS)
    assert bool(jnp.all(jnp.isfinite(out)))
    assert bool(jnp.all((out >= 0.0) & (out <= 1.0)))       # sigmoid range
    # loose tolerance: bf16 activations/MXU operands + approx reciprocal
    assert bool(jnp.all(jnp.abs(out - ref) < 5e-2))
    print("KERNEL_OK")
</pallas_src>

<mosaic_0001>
module attributes {stable_mosaic.version = 11 : i64} {
  func.func @_gat_project_kernel(%arg0: i32, %arg1: memref<128x4xf32, #tpu.memory_space<vmem>>, %arg2: memref<4x128xf32, #tpu.memory_space<vmem>>, %arg3: memref<128x16xf32, #tpu.memory_space<vmem>>, %arg4: memref<128x16xf32, #tpu.memory_space<vmem>>, %arg5: memref<128x128xbf16, #tpu.memory_space<vmem>>, %arg6: memref<128x16xf32, #tpu.memory_space<vmem>>, %arg7: memref<128x16xf32, #tpu.memory_space<vmem>>) attributes {dimension_semantics = [#tpu.dimension_semantics<parallel>], iteration_bounds = array<i64: 1>, scalar_prefetch = 0 : i64, scratch_operands = 0 : i64, tpu.core_type = #tpu.core_type<tc>, window_params = [{transform_indices = @transform_0, window_bounds = array<i64: 128, 4>}, {pipeline_mode = #tpu.pipeline_mode<synchronous>, transform_indices = @transform_1, window_bounds = array<i64: 4, 128>}, {pipeline_mode = #tpu.pipeline_mode<synchronous>, transform_indices = @transform_2, window_bounds = array<i64: 128, 16>}, {pipeline_mode = #tpu.pipeline_mode<synchronous>, transform_indices = @transform_3, window_bounds = array<i64: 128, 16>}, {transform_indices = @transform_4, window_bounds = array<i64: 128, 128>}, {transform_indices = @transform_5, window_bounds = array<i64: 128, 16>}, {transform_indices = @transform_6, window_bounds = array<i64: 128, 16>}]} {
    %c0 = arith.constant 0 : index
    %c0_0 = arith.constant 0 : index
    %0 = vector.load %arg1[%c0, %c0_0] : memref<128x4xf32, #tpu.memory_space<vmem>>, vector<128x4xf32>
    %c0_1 = arith.constant 0 : index
    %c0_2 = arith.constant 0 : index
    %1 = vector.load %arg2[%c0_1, %c0_2] : memref<4x128xf32, #tpu.memory_space<vmem>>, vector<4x128xf32>
    %cst = arith.constant dense<0.000000e+00> : vector<128x128xf32>
    %2 = tpu.matmul %0, %1, %cst {dimension_numbers = #tpu.dot_dimension_numbers<[1], [0], [0], [1], [0, 0, 1, 1], [], []>} : vector<128x4xf32>, vector<4x128xf32>, vector<128x128xf32> -> vector<128x128xf32>
    %c0_3 = arith.constant 0 : index
    %c0_4 = arith.constant 0 : index
    %3 = vector.load %arg3[%c0_3, %c0_4] : memref<128x16xf32, #tpu.memory_space<vmem>>, vector<128x16xf32>
    %cst_5 = arith.constant dense<0.000000e+00> : vector<128x16xf32>
    %4 = tpu.matmul %2, %3, %cst_5 {dimension_numbers = #tpu.dot_dimension_numbers<[1], [0], [0], [1], [0, 0, 1, 1], [], []>} : vector<128x128xf32>, vector<128x16xf32>, vector<128x16xf32> -> vector<128x16xf32>
    %c0_6 = arith.constant 0 : index
    %c0_7 = arith.constant 0 : index
    %5 = vector.load %arg4[%c0_6, %c0_7] : memref<128x16xf32, #tpu.memory_space<vmem>>, vector<128x16xf32>
    %cst_8 = arith.constant dense<0.000000e+00> : vector<128x16xf32>
    %6 = tpu.matmul %2, %5, %cst_8 {dimension_numbers = #tpu.dot_dimension_numbers<[1], [0], [0], [1], [0, 0, 1, 1], [], []>} : vector<128x128xf32>, vector<128x16xf32>, vector<128x16xf32> -> vector<128x16xf32>
    %7 = arith.truncf %2 : vector<128x128xf32> to vector<128x128xbf16>
    %c0_9 = arith.constant 0 : index
    %c0_10 = arith.constant 0 : index
    %8 = vector.load %arg5[%c0_9, %c0_10] : memref<128x128xbf16, #tpu.memory_space<vmem>>, vector<128x128xbf16>
    tpu.vector_store %arg5[%c0_9, %c0_10], %7 {strides = array<i32>} : memref<128x128xbf16, #tpu.memory_space<vmem>>, vector<128x128xbf16>,
    %c0_11 = arith.constant 0 : index
    %c0_12 = arith.constant 0 : index
    %9 = vector.load %arg6[%c0_11, %c0_12] : memref<128x16xf32, #tpu.memory_space<vmem>>, vector<128x16xf32>
    tpu.vector_store %arg6[%c0_11, %c0_12], %4 {strides = array<i32>} : memref<128x16xf32, #tpu.memory_space<vmem>>, vector<128x16xf32>,
    %c0_13 = arith.constant 0 : index
    %c0_14 = arith.constant 0 : index
    %10 = vector.load %arg7[%c0_13, %c0_14] : memref<128x16xf32, #tpu.memory_space<vmem>>, vector<128x16xf32>
    tpu.vector_store %arg7[%c0_13, %c0_14], %6 {strides = array<i32>} : memref<128x16xf32, #tpu.memory_space<vmem>>, vector<128x16xf32>,
    return
  }
  func.func @transform_0(%arg0: i32) -> (i32, i32) {
    %c0_i32 = arith.constant 0 : i32
    %c0_i32_0 = arith.constant 0 : i32
    return %arg0, %c0_i32 : i32, i32
  }
  func.func @transform_1(%arg0: i32) -> (i32, i32) {
    %c0_i32 = arith.constant 0 : i32
    %c0_i32_0 = arith.constant 0 : i32
    %c0_i32_1 = arith.constant 0 : i32
    return %c0_i32, %c0_i32_0 : i32, i32
  }
  func.func @transform_2(%arg0: i32) -> (i32, i32) {
    %c0_i32 = arith.constant 0 : i32
    %c0_i32_0 = arith.constant 0 : i32
    %c0_i32_1 = arith.constant 0 : i32
    return %c0_i32, %c0_i32_0 : i32, i32
  }
  func.func @transform_3(%arg0: i32) -> (i32, i32) {
    %c0_i32 = arith.constant 0 : i32
    %c0_i32_0 = arith.constant 0 : i32
    %c0_i32_1 = arith.constant 0 : i32
    return %c0_i32, %c0_i32_0 : i32, i32
  }
  func.func @transform_4(%arg0: i32) -> (i32, i32) {
    %c0_i32 = arith.constant 0 : i32
    %c0_i32_0 = arith.constant 0 : i32
    return %arg0, %c0_i32 : i32, i32
  }
  func.func @transform_5(%arg0: i32) -> (i32, i32) {
    %c0_i32 = arith.constant 0 : i32
    %c0_i32_0 = arith.constant 0 : i32
    return %arg0, %c0_i32 : i32, i32
  }
  func.func @transform_6(%arg0: i32) -> (i32, i32) {
    %c0_i32 = arith.constant 0 : i32
    %c0_i32_0 = arith.constant 0 : i32
    return %arg0, %c0_i32 : i32, i32
  }
}

</mosaic_0001>

<llo_original>
// kernel: tpu_custom_call.1
$region0: #{tpu_custom_call.1}
  #allocation0 [shape = 'u32[]', space=smem, size = 0x4, offset = 0x4, fixed_abs, tag = 'smem constant byte address 0x4 - core index']
  #allocation1 [shape = 'u32[144,128]{1,0:T(1,128)}', space=vmem, size = 0x12000, scoped, tag = 'internal scratch']
  %s0 = inlined_call_operand.vmem [shape: f32[128,4], index: 0, kind: input, shape index: {}]
  %s1 = inlined_call_operand.vmem [shape: f32[4,128], index: 1, kind: input, shape index: {}]
  %s2 = inlined_call_operand.vmem [shape: f32[128,16], index: 2, kind: input, shape index: {}]
  %s3 = inlined_call_operand.vmem [shape: f32[128,16], index: 3, kind: input, shape index: {}]
  %s4 = inlined_call_operand.hbm [shape: bf16[128,128], index: 4, kind: output, shape index: {0}]
  %s5 = inlined_call_operand.vmem [shape: f32[128,16], index: 5, kind: output, shape index: {1}]
  %s6 = inlined_call_operand.vmem [shape: f32[128,16], index: 6, kind: output, shape index: {2}]
  %7 = xla_tuple %s4, %s5, %s6
  %s8 = sld [smem:[#allocation0]]
  $region42: #{tpu_custom_call.1} parent=0
    _
  %s10 = ssub.s32 1, %s8
  %s11 = scalar_select 0, %s10, %s8
  $region1: #{tpu_custom_call.1} parent=0
    #allocation2 [shape = 'u8[32768]{0}', space=vmem, size = 0x8000, scoped, tag = 'output window, operand 0, single buffered']
    #allocation3 [shape = 's32[1]{0}', space=sflag, size = 0x4, scoped, tag = 'scoped memory for tpu_custom_call.1']
    %12 = vsyncpa [#allocation3], 0
    // Predicated region
    $region2: #{tpu_custom_call.1} parent=1 // pred_check
      _
    $region3: #{tpu_custom_call.1} parent=1 // pred_check_branch
      %14 = sbr.rel (0) target = $region5
    $region4: #{tpu_custom_call.1} parent=1 // pred_region
      _
    $region5: #{tpu_custom_call.1} parent=1 // pred_fallthru
      _
    // Predicated region
    $region6: #{tpu_custom_call.1} parent=1 // pred_check
      _
    $region7: #{tpu_custom_call.1} parent=1 // pred_check_branch
      %16 = sbr.rel (0) target = $region9
    $region8: #{tpu_custom_call.1} parent=1 // pred_region
      _
    $region9: #{tpu_custom_call.1} parent=1 // pred_fallthru
      _
    // Predicated region
    $region10: #{tpu_custom_call.1} parent=1 // pred_check
      _
    $region11: #{tpu_custom_call.1} parent=1 // pred_check_branch
      %18 = sbr.rel (0) target = $region13
    $region12: #{tpu_custom_call.1} parent=1 // pred_region
      _
    $region13: #{tpu_custom_call.1} parent=1 // pred_fallthru
      _
    // Predicated region
    $region14: #{tpu_custom_call.1} parent=1 // pred_check
      _
    $region15: #{tpu_custom_call.1} parent=1 // pred_check_branch
      %20 = sbr.rel (0) target = $region17
    $region16: #{tpu_custom_call.1} parent=1 // pred_region
      _
    $region17: #{tpu_custom_call.1} parent=1 // pred_fallthru
      _
    %v21 = vld [vmem:[%s0] sm:$0xff]
    %v22 = vld [vmem:[%s0 + $0x8] sm:$0xff]
    %v23 = vld [vmem:[%s0 + $0x10] sm:$0xff]
    %v24 = vld [vmem:[%s0 + $0x18] sm:$0xff]
    %v25 = vld [vmem:[%s0 + $0x20] sm:$0xff]
    %v26 = vld [vmem:[%s0 + $0x28] sm:$0xff]
    %v27 = vld [vmem:[%s0 + $0x30] sm:$0xff]
    %v28 = vld [vmem:[%s0 + $0x38] sm:$0xff]
    %v29 = vld [vmem:[%s0 + $0x40] sm:$0xff]
    %v30 = vld [vmem:[%s0 + $0x48] sm:$0xff]
    %v31 = vld [vmem:[%s0 + $0x50] sm:$0xff]
    %v32 = vld [vmem:[%s0 + $0x58] sm:$0xff]
    %v33 = vld [vmem:[%s0 + $0x60] sm:$0xff]
    %v34 = vld [vmem:[%s0 + $0x68] sm:$0xff]
    %v35 = vld [vmem:[%s0 + $0x70] sm:$0xff]
    %v36 = vld [vmem:[%s0 + $0x78] sm:$0xff]
    %v37 = vld [vmem:[%s1] sm:$0xf]
    %vm38 = vcmask 31744
    %v40 = vsel %vm38, %v21, 0
    %v43 = vsel %vm38, %v22, 0
    %v46 = vsel %vm38, %v23, 0
    %v49 = vsel %vm38, %v24, 0
    %v52 = vsel %vm38, %v25, 0
    %v55 = vsel %vm38, %v26, 0
    %v58 = vsel %vm38, %v27, 0
    %v61 = vsel %vm38, %v28, 0
    %v64 = vsel %vm38, %v29, 0
    %v67 = vsel %vm38, %v30, 0
    %v70 = vsel %vm38, %v31, 0
    %v73 = vsel %vm38, %v32, 0
    %v76 = vsel %vm38, %v33, 0
    %v79 = vsel %vm38, %v34, 0
    %v82 = vsel %vm38, %v35, 0
    %v85 = vsel %vm38, %v36, 0
    %vm87 = vcmask 1043456
    %v89 = vsel %vm87, %v37, 0
    %91 = vmatprep.subr.mxu0 0.0
    %92 = vmatpush1.msra.mxu0 %v89
    %93 = vmatprep.subr.mxu0 0.0
    %94 = vmatpush1.msra.mxu0 0.0
    %95 = vmatprep.subr.mxu0 0.0
    %96 = vmatpush1.msra.mxu0 0.0
    %97 = vmatprep.subr.mxu0 0.0
    %98 = vmatpush1.msra.mxu0 0.0
    %99 = vmatprep.subr.mxu0 0.0
    %100 = vmatpush1.msra.mxu0 0.0
    %101 = vmatprep.subr.mxu0 0.0
    %102 = vmatpush1.msra.mxu0 0.0
    %103 = vmatprep.subr.mxu0 0.0
    %104 = vmatpush1.msra.mxu0 0.0
    %105 = vmatprep.subr.mxu0 0.0
    %106 = vmatpush1.msra.mxu0 0.0
    %107 = vmatprep.subr.mxu0 0.0
    %108 = vmatpush1.msra.mxu0 0.0
    %109 = vmatprep.subr.mxu0 0.0
    %110 = vmatpush1.msra.mxu0 0.0
    %111 = vmatprep.subr.mxu0 0.0
    %112 = vmatpush1.msra.mxu0 0.0
    %113 = vmatprep.subr.mxu0 0.0
    %114 = vmatpush1.msra.mxu0 0.0
    %115 = vmatprep.subr.mxu0 0.0
    %116 = vmatpush1.msra.mxu0 0.0
    %117 = vmatprep.subr.mxu0 0.0
    %118 = vmatpush1.msra.mxu0 0.0
    %119 = vmatprep.subr.mxu0 0.0
    %120 = vmatpush1.msra.mxu0 0.0
    %121 = vmatprep.subr.mxu0 0.0
    %122 = vmatpush1.msra.mxu0 0.0
    %123 = vmatprep.subr.mxu0 0.0
    %124 = vmatpush1.msra.mxu0 0.0
    %125 = vmatprep.subr.mxu0 0.0
    %126 = vmatpush1.msra.mxu0 0.0
    %127 = vmatprep.subr.mxu0 0.0
    %128 = vmatpush1.msra.mxu0 0.0
    %129 = vmatprep.subr.mxu0 0.0
    %130 = vmatpush1.msra.mxu0 0.0
    %131 = vmatprep.subr.mxu0 0.0
    %132 = vmatpush1.msra.mxu0 0.0
    %133 = vmatprep.subr.mxu0 0.0
    %134 = vmatpush1.msra.mxu0 0.0
    %135 = vmatprep.subr.mxu0 0.0
    %136 = vmatpush1.msra.mxu0 0.0
    %137 = vmatprep.subr.mxu0 0.0
    %138 = vmatpush1.msra.mxu0 0.0
    %139 = vmatprep.subr.mxu0 0.0
    %140 = vmatpush1.msra.mxu0 0.0
    %141 = vmatprep.subr.mxu0 0.0
    %142 = vmatpush1.msra.mxu0 0.0
    %143 = vmatprep.subr.mxu0 0.0
    %144 = vmatpush1.msra.mxu0 0.0
    %145 = vmatprep.subr.mxu0 0.0
    %146 = vmatpush1.msra.mxu0 0.0
    %147 = vmatprep.subr.mxu0 0.0
    %148 = vmatpush1.msra.mxu0 0.0
    %149 = vmatprep.subr.mxu0 0.0
    %150 = vmatpush1.msra.mxu0 0.0
    %151 = vmatprep.subr.mxu0 0.0
    %152 = vmatpush1.msra.mxu0 0.0
    %153 = vmatprep.subr.mxu0 0.0
    %154 = vmatpush1.msra.mxu0 0.0
    %155 = vmatprep.mubr.f32.mxu0 0.0
    %156 = vmatmul.mubr.f32.gmra.mrb[0].mxu0 %v40
    %v157 = vpop.f32.mrb[0].mxu0
    %v158 = vadd.f32 0.0, %v157
    %v159 = vpop.f32.mrb[0].mxu0
    %160 = vmatprep.mubr.f32.mxu0 0.0
    %161 = vmatmul.mubr.f32.gmra.mrb[0].mxu0 %v43
    %v162 = vpop.f32.mrb[0].mxu0
    %v163 = vadd.f32 0.0, %v162
    %v164 = vpop.f32.mrb[0].mxu0
    %165 = vmatprep.mubr.f32.mxu0 0.0
    %166 = vmatmul.mubr.f32.gmra.mrb[0].mxu0 %v46
    %v167 = vpop.f32.mrb[0].mxu0
    %v168 = vadd.f32 0.0, %v167
    %v169 = vpop.f32.mrb[0].mxu0
    %170 = vmatprep.mubr.f32.mxu0 0.0
    %171 = vmatmul.mubr.f32.gmra.mrb[0].mxu0 %v49
    %v172 = vpop.f32.mrb[0].mxu0
    %v173 = vadd.f32 0.0, %v172
    %v174 = vpop.f32.mrb[0].mxu0
    %175 = vmatprep.mubr.f32.mxu0 0.0
    %176 = vmatmul.mubr.f32.gmra.mrb[0].mxu0 %v52
    %v177 = vpop.f32.mrb[0].mxu0
    %v178 = vadd.f32 0.0, %v177
    %v179 = vpop.f32.mrb[0].mxu0
    %180 = vmatprep.mubr.f32.mxu0 0.0
    %181 = vmatmul.mubr.f32.gmra.mrb[0].mxu0 %v55
    %v182 = vpop.f32.mrb[0].mxu0
    %v183 = vadd.f32 0.0, %v182
    %v184 = vpop.f32.mrb[0].mxu0
    %185 = vmatprep.mubr.f32.mxu0 0.0
    %186 = vmatmul.mubr.f32.gmra.mrb[0].mxu0 %v58
    %v187 = vpop.f32.mrb[0].mxu0
    %v188 = vadd.f32 0.0, %v187
    %v189 = vpop.f32.mrb[0].mxu0
    %190 = vmatprep.mubr.f32.mxu0 0.0
    %191 = vmatmul.mubr.f32.gmra.mrb[0].mxu0 %v61
    %v192 = vpop.f32.mrb[0].mxu0
    %v193 = vadd.f32 0.0, %v192
    %v194 = vpop.f32.mrb[0].mxu0
    %195 = vmatprep.mubr.f32.mxu0 0.0
    %196 = vmatmul.mubr.f32.gmra.mrb[0].mxu0 %v64
    %v197 = vpop.f32.mrb[0].mxu0
    %v198 = vadd.f32 0.0, %v197
    %v199 = vpop.f32.mrb[0].mxu0
    %200 = vmatprep.mubr.f32.mxu0 0.0
    %201 = vmatmul.mubr.f32.gmra.mrb[0].mxu0 %v67
    %v202 = vpop.f32.mrb[0].mxu0
    %v203 = vadd.f32 0.0, %v202
    %v204 = vpop.f32.mrb[0].mxu0
    %205 = vmatprep.mubr.f32.mxu0 0.0
    %206 = vmatmul.mubr.f32.gmra.mrb[0].mxu0 %v70
    %v207 = vpop.f32.mrb[0].mxu0
    %v208 = vadd.f32 0.0, %v207
    %v209 = vpop.f32.mrb[0].mxu0
    %210 = vmatprep.mubr.f32.mxu0 0.0
    %211 = vmatmul.mubr.f32.gmra.mrb[0].mxu0 %v73
    %v212 = vpop.f32.mrb[0].mxu0
    %v213 = vadd.f32 0.0, %v212
    %v214 = vpop.f32.mrb[0].mxu0
    %215 = vmatprep.mubr.f32.mxu0 0.0
    %216 = vmatmul.mubr.f32.gmra.mrb[0].mxu0 %v76
    %v217 = vpop.f32.mrb[0].mxu0
    %v218 = vadd.f32 0.0, %v217
    %v219 = vpop.f32.mrb[0].mxu0
    %220 = vmatprep.mubr.f32.mxu0 0.0
    %221 = vmatmul.mubr.f32.gmra.mrb[0].mxu0 %v79
    %v222 = vpop.f32.mrb[0].mxu0
    %v223 = vadd.f32 0.0, %v222
    %v224 = vpop.f32.mrb[0].mxu0
    %225 = vmatprep.mubr.f32.mxu0 0.0
    %226 = vmatmul.mubr.f32.gmra.mrb[0].mxu0 %v82
    %v227 = vpop.f32.mrb[0].mxu0
    %v228 = vadd.f32 0.0, %v227
    %v229 = vpop.f32.mrb[0].mxu0
    %230 = vmatprep.mubr.f32.mxu0 0.0
    %231 = vmatmul.mubr.f32.gmra.mrb[0].mxu0 %v85
    %v232 = vpop.f32.mrb[0].mxu0
    %v233 = vadd.f32 0.0, %v232
    %v234 = vpop.f32.mrb[0].mxu0
    %235 = vdwg.mxu0
    %v236 = vld [vmem:[%s2] sm:$0xff]
    %v237 = vld [vmem:[%s2 + $0x8] sm:$0xff]
    %v238 = vld [vmem:[%s2 + $0x10] sm:$0xff]
    %v239 = vld [vmem:[%s2 + $0x18] sm:$0xff]
    %v240 = vld [vmem:[%s2 + $0x20] sm:$0xff]
    %v241 = vld [vmem:[%s2 + $0x28] sm:$0xff]
    %v242 = vld [vmem:[%s2 + $0x30] sm:$0xff]
    %v243 = vld [vmem:[%s2 + $0x38] sm:$0xff]
    %v244 = vld [vmem:[%s2 + $0x40] sm:$0xff]
    %v245 = vld [vmem:[%s2 + $0x48] sm:$0xff]
    %v246 = vld [vmem:[%s2 + $0x50] sm:$0xff]
    %v247 = vld [vmem:[%s2 + $0x58] sm:$0xff]
    %v248 = vld [vmem:[%s2 + $0x60] sm:$0xff]
    %v249 = vld [vmem:[%s2 + $0x68] sm:$0xff]
    %v250 = vld [vmem:[%s2 + $0x70] sm:$0xff]
    %v251 = vld [vmem:[%s2 + $0x78] sm:$0xff]
    %252 = vmatprep.subr.mxu0 0.0
    %253 = vmatpush1.msra.mxu0 %v236
    %254 = vmatprep.subr.mxu0 0.0
    %255 = vmatpush1.msra.mxu0 %v237
    %256 = vmatprep.subr.mxu0 0.0
    %257 = vmatpush1.msra.mxu0 %v238
    %258 = vmatprep.subr.mxu0 0.0
    %259 = vmatpush1.msra.mxu0 %v239
    %260 = vmatprep.subr.mxu0 0.0
    %261 = vmatpush1.msra.mxu0 %v240
    %262 = vmatprep.subr.mxu0 0.0
    %263 = vmatpush1.msra.mxu0 %v241
    %264 = vmatprep.subr.mxu0 0.0
    %265 = vmatpush1.msra.mxu0 %v242
    %266 = vmatprep.subr.mxu0 0.0
    %267 = vmatpush1.msra.mxu0 %v243
    %268 = vmatprep.subr.mxu0 0.0
    %269 = vmatpush1.msra.mxu0 %v244
    %270 = vmatprep.subr.mxu0 0.0
    %271 = vmatpush1.msra.mxu0 %v245
    %272 = vmatprep.subr.mxu0 0.0
    %273 = vmatpush1.msra.mxu0 %v246
    %274 = vmatprep.subr.mxu0 0.0
    %275 = vmatpush1.msra.mxu0 %v247
    %276 = vmatprep.subr.mxu0 0.0
    %277 = vmatpush1.msra.mxu0 %v248
    %278 = vmatprep.subr.mxu0 0.0
    %279 = vmatpush1.msra.mxu0 %v249
    %280 = vmatprep.subr.mxu0 0.0
    %281 = vmatpush1.msra.mxu0 %v250
    %282 = vmatprep.subr.mxu0 0.0
    %283 = vmatpush1.msra.mxu0 %v251
    %284 = vmatprep.subr.mxu0 0.0
    %285 = vmatpush1.msra.mxu0 0.0
    %286 = vmatprep.subr.mxu0 0.0
    %287 = vmatpush1.msra.mxu0 0.0
    %288 = vmatprep.subr.mxu0 0.0
    %289 = vmatpush1.msra.mxu0 0.0
    %290 = vmatprep.subr.mxu0 0.0
    %291 = vmatpush1.msra.mxu0 0.0
    %292 = vmatprep.subr.mxu0 0.0
    %293 = vmatpush1.msra.mxu0 0.0
    %294 = vmatprep.subr.mxu0 0.0
    %295 = vmatpush1.msra.mxu0 0.0
    %296 = vmatprep.subr.mxu0 0.0
    %297 = vmatpush1.msra.mxu0 0.0
    %298 = vmatprep.subr.mxu0 0.0
    %299 = vmatpush1.msra.mxu0 0.0
    %300 = vmatprep.subr.mxu0 0.0
    %301 = vmatpush1.msra.mxu0 0.0
    %302 = vmatprep.subr.mxu0 0.0
    %303 = vmatpush1.msra.mxu0 0.0
    %304 = vmatprep.subr.mxu0 0.0
    %305 = vmatpush1.msra.mxu0 0.0
    %306 = vmatprep.subr.mxu0 0.0
    %307 = vmatpush1.msra.mxu0 0.0
    %308 = vmatprep.subr.mxu0 0.0
    %309 = vmatpush1.msra.mxu0 0.0
    %310 = vmatprep.subr.mxu0 0.0
    %311 = vmatpush1.msra.mxu0 0.0
    %312 = vmatprep.subr.mxu0 0.0
    %313 = vmatpush1.msra.mxu0 0.0
    %314 = vmatprep.subr.mxu0 0.0
    %315 = vmatpush1.msra.mxu0 0.0
    %316 = vmatprep.mubr.f32.mxu0 0.0
    %317 = vmatmul.mubr.f32.gmra.mrb[0].mxu0 %v158
    %v318 = vpop.f32.mrb[0].mxu0
    %v319 = vadd.f32 0.0, %v318
    %v320 = vpop.f32.mrb[0].mxu0
    %321 = vmatprep.mubr.f32.mxu0 0.0
    %322 = vmatmul.mubr.f32.gmra.mrb[0].mxu0 %v163
    %v323 = vpop.f32.mrb[0].mxu0
    %v324 = vadd.f32 0.0, %v323
    %v325 = vpop.f32.mrb[0].mxu0
    %326 = vmatprep.mubr.f32.mxu0 0.0
    %327 = vmatmul.mubr.f32.gmra.mrb[0].mxu0 %v168
    %v328 = vpop.f32.mrb[0].mxu0
    %v329 = vadd.f32 0.0, %v328
    %v330 = vpop.f32.mrb[0].mxu0
    %331 = vmatprep.mubr.f32.mxu0 0.0
    %332 = vmatmul.mubr.f32.gmra.mrb[0].mxu0 %v173
    %v333 = vpop.f32.mrb[0].mxu0
    %v334 = vadd.f32 0.0, %v333
    %v335 = vpop.f32.mrb[0].mxu0
    %336 = vmatprep.mubr.f32.mxu0 0.0
    %337 = vmatmul.mubr.f32.gmra.mrb[0].mxu0 %v178
    %v338 = vpop.f32.mrb[0].mxu0
    %v339 = vadd.f32 0.0, %v338
    %v340 = vpop.f32.mrb[0].mxu0
    %341 = vmatprep.mubr.f32.mxu0 0.0
    %342 = vmatmul.mubr.f32.gmra.mrb[0].mxu0 %v183
    %v343 = vpop.f32.mrb[0].mxu0
    %v344 = vadd.f32 0.0, %v343
    %v345 = vpop.f32.mrb[0].mxu0
    %346 = vmatprep.mubr.f32.mxu0 0.0
    %347 = vmatmul.mubr.f32.gmra.mrb[0].mxu0 %v188
    %v348 = vpop.f32.mrb[0].mxu0
    %v349 = vadd.f32 0.0, %v348
    %v350 = vpop.f32.mrb[0].mxu0
    %351 = vmatprep.mubr.f32.mxu0 0.0
    %352 = vmatmul.mubr.f32.gmra.mrb[0].mxu0 %v193
    %v353 = vpop.f32.mrb[0].mxu0
    %v354 = vadd.f32 0.0, %v353
    %v355 = vpop.f32.mrb[0].mxu0
    %356 = vmatprep.mubr.f32.mxu0 0.0
    %357 = vmatmul.mubr.f32.gmra.mrb[0].mxu0 %v198
    %v358 = vpop.f32.mrb[0].mxu0
    %v359 = vadd.f32 0.0, %v358
    %v360 = vpop.f32.mrb[0].mxu0
    %361 = vmatprep.mubr.f32.mxu0 0.0
    %362 = vmatmul.mubr.f32.gmra.mrb[0].mxu0 %v203
    %v363 = vpop.f32.mrb[0].mxu0
    %v364 = vadd.f32 0.0, %v363
    %v365 = vpop.f32.mrb[0].mxu0
    %366 = vmatprep.mubr.f32.mxu0 0.0
    %367 = vmatmul.mubr.f32.gmra.mrb[0].mxu0 %v208
    %v368 = vpop.f32.mrb[0].mxu0
    %v369 = vadd.f32 0.0, %v368
    %v370 = vpop.f32.mrb[0].mxu0
    %371 = vmatprep.mubr.f32.mxu0 0.0
    %372 = vmatmul.mubr.f32.gmra.mrb[0].mxu0 %v213
    %v373 = vpop.f32.mrb[0].mxu0
    %v374 = vadd.f32 0.0, %v373
    %v375 = vpop.f32.mrb[0].mxu0
    %376 = vmatprep.mubr.f32.mxu0 0.0
    %377 = vmatmul.mubr.f32.gmra.mrb[0].mxu0 %v218
    %v378 = vpop.f32.mrb[0].mxu0
    %v379 = vadd.f32 0.0, %v378
    %v380 = vpop.f32.mrb[0].mxu0
    %381 = vmatprep.mubr.f32.mxu0 0.0
    %382 = vmatmul.mubr.f32.gmra.mrb[0].mxu0 %v223
    %v383 = vpop.f32.mrb[0].mxu0
    %v384 = vadd.f32 0.0, %v383
    %v385 = vpop.f32.mrb[0].mxu0
    %386 = vmatprep.mubr.f32.mxu0 0.0
    %387 = vmatmul.mubr.f32.gmra.mrb[0].mxu0 %v228
    %v388 = vpop.f32.mrb[0].mxu0
    %v389 = vadd.f32 0.0, %v388
    %v390 = vpop.f32.mrb[0].mxu0
    %391 = vmatprep.mubr.f32.mxu0 0.0
    %392 = vmatmul.mubr.f32.gmra.mrb[0].mxu0 %v233
    %v393 = vpop.f32.mrb[0].mxu0
    %v394 = vadd.f32 0.0, %v393
    %v395 = vpop.f32.mrb[0].mxu0
    %396 = vdwg.mxu0
    %v397 = vld [vmem:[%s3] sm:$0xff]
    %v398 = vld [vmem:[%s3 + $0x8] sm:$0xff]
    %v399 = vld [vmem:[%s3 + $0x10] sm:$0xff]
    %v400 = vld [vmem:[%s3 + $0x18] sm:$0xff]
    %v401 = vld [vmem:[%s3 + $0x20] sm:$0xff]
    %v402 = vld [vmem:[%s3 + $0x28] sm:$0xff]
    %v403 = vld [vmem:[%s3 + $0x30] sm:$0xff]
    %v404 = vld [vmem:[%s3 + $0x38] sm:$0xff]
    %v405 = vld [vmem:[%s3 + $0x40] sm:$0xff]
    %v406 = vld [vmem:[%s3 + $0x48] sm:$0xff]
    %v407 = vld [vmem:[%s3 + $0x50] sm:$0xff]
    %v408 = vld [vmem:[%s3 + $0x58] sm:$0xff]
    %v409 = vld [vmem:[%s3 + $0x60] sm:$0xff]
    %v410 = vld [vmem:[%s3 + $0x68] sm:$0xff]
    %v411 = vld [vmem:[%s3 + $0x70] sm:$0xff]
    %v412 = vld [vmem:[%s3 + $0x78] sm:$0xff]
    %413 = vmatprep.subr.mxu0 0.0
    %414 = vmatpush1.msra.mxu0 %v397
    %415 = vmatprep.subr.mxu0 0.0
    %416 = vmatpush1.msra.mxu0 %v398
    %417 = vmatprep.subr.mxu0 0.0
    %418 = vmatpush1.msra.mxu0 %v399
    %419 = vmatprep.subr.mxu0 0.0
    %420 = vmatpush1.msra.mxu0 %v400
    %421 = vmatprep.subr.mxu0 0.0
    %422 = vmatpush1.msra.mxu0 %v401
    %423 = vmatprep.subr.mxu0 0.0
    %424 = vmatpush1.msra.mxu0 %v402
    %425 = vmatprep.subr.mxu0 0.0
    %426 = vmatpush1.msra.mxu0 %v403
    %427 = vmatprep.subr.mxu0 0.0
    %428 = vmatpush1.msra.mxu0 %v404
    %429 = vmatprep.subr.mxu0 0.0
    %430 = vmatpush1.msra.mxu0 %v405
    %431 = vmatprep.subr.mxu0 0.0
    %432 = vmatpush1.msra.mxu0 %v406
    %433 = vmatprep.subr.mxu0 0.0
    %434 = vmatpush1.msra.mxu0 %v407
    %435 = vmatprep.subr.mxu0 0.0
    %436 = vmatpush1.msra.mxu0 %v408
    %437 = vmatprep.subr.mxu0 0.0
    %438 = vmatpush1.msra.mxu0 %v409
    %439 = vmatprep.subr.mxu0 0.0
    %440 = vmatpush1.msra.mxu0 %v410
    %441 = vmatprep.subr.mxu0 0.0
    %442 = vmatpush1.msra.mxu0 %v411
    %443 = vmatprep.subr.mxu0 0.0
    %444 = vmatpush1.msra.mxu0 %v412
    %445 = vmatprep.subr.mxu0 0.0
    %446 = vmatpush1.msra.mxu0 0.0
    %447 = vmatprep.subr.mxu0 0.0
    %448 = vmatpush1.msra.mxu0 0.0
    %449 = vmatprep.subr.mxu0 0.0
    %450 = vmatpush1.msra.mxu0 0.0
    %451 = vmatprep.subr.mxu0 0.0
    %452 = vmatpush1.msra.mxu0 0.0
    %453 = vmatprep.subr.mxu0 0.0
    %454 = vmatpush1.msra.mxu0 0.0
    %455 = vmatprep.subr.mxu0 0.0
    %456 = vmatpush1.msra.mxu0 0.0
    %457 = vmatprep.subr.mxu0 0.0
    %458 = vmatpush1.msra.mxu0 0.0
    %459 = vmatprep.subr.mxu0 0.0
    %460 = vmatpush1.msra.mxu0 0.0
    %461 = vmatprep.subr.mxu0 0.0
    %462 = vmatpush1.msra.mxu0 0.0
    %463 = vmatprep.subr.mxu0 0.0
    %464 = vmatpush1.msra.mxu0 0.0
    %465 = vmatprep.subr.mxu0 0.0
    %466 = vmatpush1.msra.mxu0 0.0
    %467 = vmatprep.subr.mxu0 0.0
    %468 = vmatpush1.msra.mxu0 0.0
    %469 = vmatprep.subr.mxu0 0.0
    %470 = vmatpush1.msra.mxu0 0.0
    %471 = vmatprep.subr.mxu0 0.0
    %472 = vmatpush1.msra.mxu0 0.0
    %473 = vmatprep.subr.mxu0 0.0
    %474 = vmatpush1.msra.mxu0 0.0
    %475 = vmatprep.subr.mxu0 0.0
    %476 = vmatpush1.msra.mxu0 0.0
    %477 = vmatprep.mubr.f32.mxu0 0.0
    %478 = vmatmul.mubr.f32.gmra.mrb[0].mxu0 %v158
    %v479 = vpop.f32.mrb[0].mxu0
    %v480 = vadd.f32 0.0, %v479
    %v481 = vpop.f32.mrb[0].mxu0
    %482 = vmatprep.mubr.f32.mxu0 0.0
    %483 = vmatmul.mubr.f32.gmra.mrb[0].mxu0 %v163
    %v484 = vpop.f32.mrb[0].mxu0
    %v485 = vadd.f32 0.0, %v484
    %v486 = vpop.f32.mrb[0].mxu0
    %487 = vmatprep.mubr.f32.mxu0 0.0
    %488 = vmatmul.mubr.f32.gmra.mrb[0].mxu0 %v168
    %v489 = vpop.f32.mrb[0].mxu0
    %v490 = vadd.f32 0.0, %v489
    %v491 = vpop.f32.mrb[0].mxu0
    %492 = vmatprep.mubr.f32.mxu0 0.0
    %493 = vmatmul.mubr.f32.gmra.mrb[0].mxu0 %v173
    %v494 = vpop.f32.mrb[0].mxu0
    %v495 = vadd.f32 0.0, %v494
    %v496 = vpop.f32.mrb[0].mxu0
    %497 = vmatprep.mubr.f32.mxu0 0.0
    %498 = vmatmul.mubr.f32.gmra.mrb[0].mxu0 %v178
    %v499 = vpop.f32.mrb[0].mxu0
    %v500 = vadd.f32 0.0, %v499
    %v501 = vpop.f32.mrb[0].mxu0
    %502 = vmatprep.mubr.f32.mxu0 0.0
    %503 = vmatmul.mubr.f32.gmra.mrb[0].mxu0 %v183
    %v504 = vpop.f32.mrb[0].mxu0
    %v505 = vadd.f32 0.0, %v504
    %v506 = vpop.f32.mrb[0].mxu0
    %507 = vmatprep.mubr.f32.mxu0 0.0
    %508 = vmatmul.mubr.f32.gmra.mrb[0].mxu0 %v188
    %v509 = vpop.f32.mrb[0].mxu0
    %v510 = vadd.f32 0.0, %v509
    %v511 = vpop.f32.mrb[0].mxu0
    %512 = vmatprep.mubr.f32.mxu0 0.0
    %513 = vmatmul.mubr.f32.gmra.mrb[0].mxu0 %v193
    %v514 = vpop.f32.mrb[0].mxu0
    %v515 = vadd.f32 0.0, %v514
    %v516 = vpop.f32.mrb[0].mxu0
    %517 = vmatprep.mubr.f32.mxu0 0.0
    %518 = vmatmul.mubr.f32.gmra.mrb[0].mxu0 %v198
    %v519 = vpop.f32.mrb[0].mxu0
    %v520 = vadd.f32 0.0, %v519
    %v521 = vpop.f32.mrb[0].mxu0
    %522 = vmatprep.mubr.f32.mxu0 0.0
    %523 = vmatmul.mubr.f32.gmra.mrb[0].mxu0 %v203
    %v524 = vpop.f32.mrb[0].mxu0
    %v525 = vadd.f32 0.0, %v524
    %v526 = vpop.f32.mrb[0].mxu0
    %527 = vmatprep.mubr.f32.mxu0 0.0
    %528 = vmatmul.mubr.f32.gmra.mrb[0].mxu0 %v208
    %v529 = vpop.f32.mrb[0].mxu0
    %v530 = vadd.f32 0.0, %v529
    %v531 = vpop.f32.mrb[0].mxu0
    %532 = vmatprep.mubr.f32.mxu0 0.0
    %533 = vmatmul.mubr.f32.gmra.mrb[0].mxu0 %v213
    %v534 = vpop.f32.mrb[0].mxu0
    %v535 = vadd.f32 0.0, %v534
    %v536 = vpop.f32.mrb[0].mxu0
    %537 = vmatprep.mubr.f32.mxu0 0.0
    %538 = vmatmul.mubr.f32.gmra.mrb[0].mxu0 %v218
    %v539 = vpop.f32.mrb[0].mxu0
    %v540 = vadd.f32 0.0, %v539
    %v541 = vpop.f32.mrb[0].mxu0
    %542 = vmatprep.mubr.f32.mxu0 0.0
    %543 = vmatmul.mubr.f32.gmra.mrb[0].mxu0 %v223
    %v544 = vpop.f32.mrb[0].mxu0
    %v545 = vadd.f32 0.0, %v544
    %v546 = vpop.f32.mrb[0].mxu0
    %547 = vmatprep.mubr.f32.mxu0 0.0
    %548 = vmatmul.mubr.f32.gmra.mrb[0].mxu0 %v228
    %v549 = vpop.f32.mrb[0].mxu0
    %v550 = vadd.f32 0.0, %v549
    %v551 = vpop.f32.mrb[0].mxu0
    %552 = vmatprep.mubr.f32.mxu0 0.0
    %553 = vmatmul.mubr.f32.gmra.mrb[0].mxu0 %v233
    %v554 = vpop.f32.mrb[0].mxu0
    %v555 = vadd.f32 0.0, %v554
    %v556 = vpop.f32.mrb[0].mxu0
    %557 = vdwg.mxu0
    %v558 = vpack.c.bf16 %v163, %v158
    %v559 = vpack.c.bf16 %v173, %v168
    %v560 = vpack.c.bf16 %v183, %v178
    %v561 = vpack.c.bf16 %v193, %v188
    %v562 = vpack.c.bf16 %v203, %v198
    %v563 = vpack.c.bf16 %v213, %v208
    %v564 = vpack.c.bf16 %v223, %v218
    %v565 = vpack.c.bf16 %v233, %v228
    %v574 = vunpack.c.l.b16 %v558
    %v575 = vunpack.c.h.b16 %v558
    %v576 = vunpack.c.l.b16 %v559
    %v577 = vunpack.c.h.b16 %v559
    %v578 = vunpack.c.l.b16 %v560
    %v579 = vunpack.c.h.b16 %v560
    %v580 = vunpack.c.l.b16 %v561
    %v581 = vunpack.c.h.b16 %v561
    %v582 = vunpack.c.l.b16 %v562
    %v583 = vunpack.c.h.b16 %v562
    %v584 = vunpack.c.l.b16 %v563
    %v585 = vunpack.c.h.b16 %v563
    %v586 = vunpack.c.l.b16 %v564
    %v587 = vunpack.c.h.b16 %v564
    %v588 = vunpack.c.l.b16 %v565
    %v589 = vunpack.c.h.b16 %v565
    %v590 = vpack.c.b16 %v574, %v574
    %v591 = vpack.c.b16 %v575, %v575
    %v592 = vpack.c.b16 %v576, %v576
    %v593 = vpack.c.b16 %v577, %v577
    %v594 = vpack.c.b16 %v578, %v578
    %v595 = vpack.c.b16 %v579, %v579
    %v596 = vpack.c.b16 %v580, %v580
    %v597 = vpack.c.b16 %v581, %v581
    %v598 = vpack.c.b16 %v582, %v582
    %v599 = vpack.c.b16 %v583, %v583
    %v600 = vpack.c.b16 %v584, %v584
    %v601 = vpack.c.b16 %v585, %v585
    %v602 = vpack.c.b16 %v586, %v586
    %v603 = vpack.c.b16 %v587, %v587
    %v604 = vpack.c.b16 %v588, %v588
    %v605 = vpack.c.b16 %v589, %v589
    %622 = vst [vmem:[#allocation2] sm:$0xf] %v590
    %623 = vst [vmem:[#allocation2 + $0x4] sm:$0xf] %v591
    %624 = vst [vmem:[#allocation2 + $0x8] sm:$0xf] %v592
    %625 = vst [vmem:[#allocation2 + $0xc] sm:$0xf] %v593
    %626 = vst [vmem:[#allocation2 + $0x10] sm:$0xf] %v594
    %627 = vst [vmem:[#allocation2 + $0x14] sm:$0xf] %v595
    %628 = vst [vmem:[#allocation2 + $0x18] sm:$0xf] %v596
    %629 = vst [vmem:[#allocation2 + $0x1c] sm:$0xf] %v597
    %630 = vst [vmem:[#allocation2 + $0x20] sm:$0xf] %v598
    %631 = vst [vmem:[#allocation2 + $0x24] sm:$0xf] %v599
    %632 = vst [vmem:[#allocation2 + $0x28] sm:$0xf] %v600
    %633 = vst [vmem:[#allocation2 + $0x2c] sm:$0xf] %v601
    %634 = vst [vmem:[#allocation2 + $0x30] sm:$0xf] %v602
    %635 = vst [vmem:[#allocation2 + $0x34] sm:$0xf] %v603
    %636 = vst [vmem:[#allocation2 + $0x38] sm:$0xf] %v604
    %637 = vst [vmem:[#allocation2 + $0x3c] sm:$0xf] %v605
    %vm638 = vcmask 130048
    %639 = vst.msk [vmem:[%s5] sm:$0xff] %vm638, %v319
    %640 = vst.msk [vmem:[%s5 + $0x8] sm:$0xff] %vm638, %v324
    %641 = vst.msk [vmem:[%s5 + $0x10] sm:$0xff] %vm638, %v329
    %642 = vst.msk [vmem:[%s5 + $0x18] sm:$0xff] %vm638, %v334
    %643 = vst.msk [vmem:[%s5 + $0x20] sm:$0xff] %vm638, %v339
    %644 = vst.msk [vmem:[%s5 + $0x28] sm:$0xff] %vm638, %v344
    %645 = vst.msk [vmem:[%s5 + $0x30] sm:$0xff] %vm638, %v349
    %646 = vst.msk [vmem:[%s5 + $0x38] sm:$0xff] %vm638, %v354
    %647 = vst.msk [vmem:[%s5 + $0x40] sm:$0xff] %vm638, %v359
    %648 = vst.msk [vmem:[%s5 + $0x48] sm:$0xff] %vm638, %v364
    %649 = vst.msk [vmem:[%s5 + $0x50] sm:$0xff] %vm638, %v369
    %650 = vst.msk [vmem:[%s5 + $0x58] sm:$0xff] %vm638, %v374
    %651 = vst.msk [vmem:[%s5 + $0x60] sm:$0xff] %vm638, %v379
    %652 = vst.msk [vmem:[%s5 + $0x68] sm:$0xff] %vm638, %v384
    %653 = vst.msk [vmem:[%s5 + $0x70] sm:$0xff] %vm638, %v389
    %654 = vst.msk [vmem:[%s5 + $0x78] sm:$0xff] %vm638, %v394
    %655 = vst.msk [vmem:[%s6] sm:$0xff] %vm638, %v480
    %656 = vst.msk [vmem:[%s6 + $0x8] sm:$0xff] %vm638, %v485
    %657 = vst.msk [vmem:[%s6 + $0x10] sm:$0xff] %vm638, %v490
    %658 = vst.msk [vmem:[%s6 + $0x18] sm:$0xff] %vm638, %v495
    %659 = vst.msk [vmem:[%s6 + $0x20] sm:$0xff] %vm638, %v500
    %660 = vst.msk [vmem:[%s6 + $0x28] sm:$0xff] %vm638, %v505
    %661 = vst.msk [vmem:[%s6 + $0x30] sm:$0xff] %vm638, %v510
    %662 = vst.msk [vmem:[%s6 + $0x38] sm:$0xff] %vm638, %v515
    %663 = vst.msk [vmem:[%s6 + $0x40] sm:$0xff] %vm638, %v520
    %664 = vst.msk [vmem:[%s6 + $0x48] sm:$0xff] %vm638, %v525
    %665 = vst.msk [vmem:[%s6 + $0x50] sm:$0xff] %vm638, %v530
    %666 = vst.msk [vmem:[%s6 + $0x58] sm:$0xff] %vm638, %v535
    %667 = vst.msk [vmem:[%s6 + $0x60] sm:$0xff] %vm638, %v540
    %668 = vst.msk [vmem:[%s6 + $0x68] sm:$0xff] %vm638, %v545
    %669 = vst.msk [vmem:[%s6 + $0x70] sm:$0xff] %vm638, %v550
    %670 = vst.msk [vmem:[%s6 + $0x78] sm:$0xff] %vm638, %v555
    // Predicated region
    $region18: #{tpu_custom_call.1} parent=1 // pred_check
      _
    $region19: #{tpu_custom_call.1} parent=1 // pred_check_branch
      %672 = sbr.rel (0) target = $region21
    $region20: #{tpu_custom_call.1} parent=1 // pred_region
      %s674 = ssub.s32 1024, 1024
      %675 = vsyncadd [#allocation3], %s674
      %s676 = sshll.u32 [#allocation2], 4
      %s677 = int_to_ptr.vmem [resolvable:$true] %s676
      %682 = dma.vmem_to_hbm [thread:$0]  %s677, 1024, %s4, [#allocation3], 64, 64, 4
    $region21: #{tpu_custom_call.1} parent=1 // pred_fallthru
      _
    // Predicated region
    $region22: #{tpu_custom_call.1} parent=1 // pred_check
      _
    $region23: #{tpu_custom_call.1} parent=1 // pred_check_branch
      %684 = sbr.rel (0) target = $region25
    $region24: #{tpu_custom_call.1} parent=1 // pred_region
      _
    $region25: #{tpu_custom_call.1} parent=1 // pred_fallthru
      _
    // Predicated region
    $region26: #{tpu_custom_call.1} parent=1 // pred_check
      _
    $region27: #{tpu_custom_call.1} parent=1 // pred_check_branch
      %686 = sbr.rel (0) target = $region29
    $region28: #{tpu_custom_call.1} parent=1 // pred_region
      _
    $region29: #{tpu_custom_call.1} parent=1 // pred_fallthru
      _
    // Predicated region
    $region30: #{tpu_custom_call.1} parent=1 // pred_check
      _
    $region31: #{tpu_custom_call.1} parent=1 // pred_check_branch
      %688 = sbr.rel (0) target = $region33
    $region32: #{tpu_custom_call.1} parent=1 // pred_region
      %689 = dma.done [#allocation3], 1024
    $region33: #{tpu_custom_call.1} parent=1 // pred_fallthru
      _
    // Predicated region
    $region34: #{tpu_custom_call.1} parent=1 // pred_check
      _
    $region35: #{tpu_custom_call.1} parent=1 // pred_check_branch
      %691 = sbr.rel (0) target = $region37
    $region36: #{tpu_custom_call.1} parent=1 // pred_region
      _
    $region37: #{tpu_custom_call.1} parent=1 // pred_fallthru
      _
    // Predicated region
    $region38: #{tpu_custom_call.1} parent=1 // pred_check
      _
    $region39: #{tpu_custom_call.1} parent=1 // pred_check_branch
      %693 = sbr.rel (0) target = $region41
    $region40: #{tpu_custom_call.1} parent=1 // pred_region
      _
    $region41: #{tpu_custom_call.1} parent=1 // pred_fallthru
      _
    %694 = vsyncpa [#allocation3], 1

</llo_original>
